<compile_context>
chip_gen: v6e
topology: v6e:2x2x1
jax: 0.10.0
libtpu: 0.0.40
codegen_flags: <defaults>
</compile_context>

<pallas_src>
import functools

import jax
import jax.numpy as jnp
from jax import lax
from jax.experimental import pallas as pl
from jax.experimental.pallas import tpu as pltpu

# ---------------- model-level constants (small, consistent with module) -------
CTX_DIM = 128          # ctx_dim (512 in CLIP; 128 here, lane-aligned)
N_CTX = 4              # "A photo of a" context tokens (+1 for SOT => prefix=5)
N_CLS_CTX = 4          # class context tokens ("X X X X")
N_DM_CTX = 1           # domain context tokens
SEQ = 16               # total prompt length (77 in CLIP; 16 here)

N_PRE = N_CTX + 1                                      # 5
N_SUF = SEQ - N_PRE - N_CLS_CTX                        # 7  (no-domain suffix)
N_INT = 2                                              # "person from"
N_SUF_D = SEQ - N_PRE - N_CLS_CTX - N_INT - N_DM_CTX   # 4  (domain suffix)

NUM_CLASS = 6
DATASET_NUM = 3
DTYPE = jnp.float32
MAX_TB = 128           # output block (tb,16,128) f32 = 1 MiB, 2 MiB dbl-buffered


# ---------------------------- kernel -------------------------------------------
def _gather_prompts_kernel(tb, idx_ref, table_ref, out_ref):
    """out[t] = table[idx[base + t]] -- one aligned (SEQ, CTX_DIM) copy per prompt.

    idx_ref:   (B_pad,) int32 in SMEM (scalar prefetch).
    table_ref: (n_rows, SEQ, CTX_DIM) fully resident in VMEM (grid-invariant).
    out_ref:   (tb, SEQ, CTX_DIM) output block for this grid step.
    """
    base = pl.program_id(0) * tb
    if tb <= 32:
        # Small static trip count: fully unroll.
        for t in range(tb):
            out_ref[t] = table_ref[idx_ref[base + t]]
    else:
        # Large tb: bounded code size / vreg pressure, still pipelined vld/vst.
        def body(t, carry):
            out_ref[t] = table_ref[idx_ref[base + t]]
            return carry
        lax.fori_loop(0, tb, body, 0, unroll=8)


# ---------------------------- wrapper helpers ------------------------------------
def _pick_tb(b, cap=MAX_TB):
    """Choose batch tile. Prefer tb | b (no padding, no out[:b] copy), as large
    as possible but <= cap. Fall back to padding only for pathological batch
    sizes (e.g. large primes) where the best divisor would blow up the grid."""
    best = max(t for t in range(1, min(b, cap) + 1) if b % t == 0)
    min_steps = int(pl.cdiv(b, cap))
    if b // best <= 2 * min_steps:
        return best, b
    tb = min(cap, b)
    return tb, int(pl.cdiv(b, tb)) * tb


def _build_table_nodomain(params):
    """(NUM_CLASS, SEQ, CTX_DIM): prefix | clsctx[c] | suffix."""
    prefix = jnp.broadcast_to(params["token_prefix"], (NUM_CLASS, N_PRE, CTX_DIM))
    suffix = jnp.broadcast_to(params["token_suffix"], (NUM_CLASS, N_SUF, CTX_DIM))
    return jnp.concatenate([prefix, params["clsctx"], suffix], axis=1)


def _build_table_domain(params):
    """(NUM_CLASS*DATASET_NUM, SEQ, CTX_DIM):
       prefix_d | stop_grad(clsctx[c]) | intermediate_d | dmctx[d] | suffix_d."""
    cls = jax.lax.stop_gradient(params["clsctx"])          # clone().detach()
    cls_b = jnp.broadcast_to(cls[:, None],
                             (NUM_CLASS, DATASET_NUM, N_CLS_CTX, CTX_DIM))
    dom_b = jnp.broadcast_to(params["dmctx"][None],
                             (NUM_CLASS, DATASET_NUM, N_DM_CTX, CTX_DIM))
    prefix = jnp.broadcast_to(params["token_prefix_domain"][None],
                              (NUM_CLASS, DATASET_NUM, N_PRE, CTX_DIM))
    inter = jnp.broadcast_to(params["token_intermediate_domain"][None],
                             (NUM_CLASS, DATASET_NUM, N_INT, CTX_DIM))
    suffix = jnp.broadcast_to(params["token_suffix_domain"][None],
                              (NUM_CLASS, DATASET_NUM, N_SUF_D, CTX_DIM))
    table = jnp.concatenate([prefix, cls_b, inter, dom_b, suffix], axis=2)
    return table.reshape(NUM_CLASS * DATASET_NUM, SEQ, CTX_DIM)


def _launch(table, idx, b, b_pad, tb):
    grid = (b_pad // tb,)
    n_rows = table.shape[0]
    out = pl.pallas_call(
        functools.partial(_gather_prompts_kernel, tb),
        out_shape=jax.ShapeDtypeStruct((b_pad, SEQ, CTX_DIM), table.dtype),
        grid_spec=pltpu.PrefetchScalarGridSpec(
            num_scalar_prefetch=1,
            grid=grid,
            in_specs=[
                # Full pre-assembled prompt table resident in VMEM (<=144 KiB).
                pl.BlockSpec((n_rows, SEQ, CTX_DIM), lambda i, idx: (0, 0, 0)),
            ],
            out_specs=pl.BlockSpec((tb, SEQ, CTX_DIM), lambda i, idx: (i, 0, 0)),
        ),
        compiler_params=pltpu.CompilerParams(
            dimension_semantics=("parallel",)),
    )(idx, table)
    # Slice only in the (rare) padded fall-back case; normal path has b_pad == b.
    return out if b_pad == b else out[:b]


# ---------------------------- forward ---------------------------------------------
def prompt_learner_forward(params, label, domain=None):
    """Pallas implementation of PromptLearner.forward.

    params: dict with clsctx, dmctx, token_prefix, token_suffix,
            token_prefix_domain, token_intermediate_domain, token_suffix_domain.
    label:  int32 (B,)
    domain: optional int32 (B,)
    returns: (B, SEQ, CTX_DIM) prompts
    """
    b = int(label.shape[0])
    tb, b_pad = _pick_tb(b)

    # Clip gather indices in the wrapper (cheap, avoids OOB VMEM reads).
    label = jnp.clip(label.astype(jnp.int32), 0, NUM_CLASS - 1)

    if domain is None:
        idx = label
        table = _build_table_nodomain(params)
    else:
        domain = jnp.clip(domain.astype(jnp.int32), 0, DATASET_NUM - 1)
        idx = label * DATASET_NUM + domain
        table = _build_table_domain(params)

    if b_pad != b:
        idx = jnp.pad(idx, (0, b_pad - b))   # pad tail repeats prompt 0; sliced off
    return _launch(table, idx, b, b_pad, tb)


# ---------------------------- pure-JAX reference --------------------------------
def prompt_learner_ref(params, label, domain=None):
    b = label.shape[0]
    cls_ctx = params["clsctx"][label]                              # (B, 4, D)
    if domain is None:
        prefix = jnp.broadcast_to(params["token_prefix"], (b, N_PRE, CTX_DIM))
        suffix = jnp.broadcast_to(params["token_suffix"], (b, N_SUF, CTX_DIM))
        return jnp.concatenate([prefix, cls_ctx, suffix], axis=1)
    dom_ctx = params["dmctx"][domain]                              # (B, 1, D)
    prefix = jnp.broadcast_to(params["token_prefix_domain"], (b, N_PRE, CTX_DIM))
    inter = jnp.broadcast_to(params["token_intermediate_domain"], (b, N_INT, CTX_DIM))
    suffix = jnp.broadcast_to(params["token_suffix_domain"], (b, N_SUF_D, CTX_DIM))
    return jnp.concatenate(
        [prefix, jax.lax.stop_gradient(cls_ctx), inter, dom_ctx, suffix], axis=1)


# ---------------------------- setup + run ----------------------------------------
def make_params(key):
    k = jax.random.split(key, 4)
    # TODO(synk): CLIP tokenizer + token_embedding are external; deterministic
    # random stand-ins are used for the registered prefix/suffix buffers.
    embedding = jax.random.normal(k[0], (1, SEQ, CTX_DIM), DTYPE)
    embedding_domain = jax.random.normal(k[1], (1, SEQ, CTX_DIM), DTYPE)
    clsctx = 0.02 * jax.random.normal(k[2], (NUM_CLASS, N_CLS_CTX, CTX_DIM), DTYPE)
    dmctx = 0.02 * jax.random.normal(k[3], (DATASET_NUM, N_DM_CTX, CTX_DIM), DTYPE)
    s = N_CTX + 1 + N_CLS_CTX                                    # 9
    return {
        "clsctx": clsctx,
        "dmctx": dmctx,
        "token_prefix": embedding[:, :N_PRE, :],
        "token_suffix": embedding[:, s:, :],
        "token_prefix_domain": embedding_domain[:, :N_PRE, :],
        "token_intermediate_domain": embedding_domain[:, s:s + N_INT, :],
        "token_suffix_domain": embedding_domain[:, s + N_INT + N_DM_CTX:, :],
    }


if __name__ == "__main__":
    key = jax.random.PRNGKey(0)
    params = make_params(key)

    # --- small batch (B=2), exercises both branches, tb=2 unrolled path ------
    label = jnp.array([1, 4], dtype=jnp.int32)
    domain = jnp.array([2, 0], dtype=jnp.int32)

    out1 = prompt_learner_forward(params, label)
    jax.block_until_ready(out1)
    assert out1.shape == (2, SEQ, CTX_DIM)
    assert jnp.allclose(out1, prompt_learner_ref(params, label), atol=1e-6), \
        "no-domain branch mismatch"

    out2 = prompt_learner_forward(params, label, domain)
    jax.block_until_ready(out2)
    assert out2.shape == (2, SEQ, CTX_DIM)
    assert jnp.allclose(out2, prompt_learner_ref(params, label, domain),
                        atol=1e-6), "domain branch mismatch"

    # --- B=10: divisor tb=10, single grid step, no padding -------------------
    kb = jax.random.split(key, 2)
    label_b = jax.random.randint(kb[0], (10,), 0, NUM_CLASS, dtype=jnp.int32)
    domain_b = jax.random.randint(kb[1], (10,), 0, DATASET_NUM, dtype=jnp.int32)

    out3 = prompt_learner_forward(params, label_b)
    jax.block_until_ready(out3)
    assert jnp.allclose(out3, prompt_learner_ref(params, label_b), atol=1e-6), \
        "no-domain batched mismatch"

    out4 = prompt_learner_forward(params, label_b, domain_b)
    jax.block_until_ready(out4)
    assert jnp.allclose(out4, prompt_learner_ref(params, label_b, domain_b),
                        atol=1e-6), "domain batched mismatch"

    # --- B=256: tb=128, grid=(2,) -> fori_loop path + both-TC parallel axis ---
    kc = jax.random.split(key, 4)
    label_c = jax.random.randint(kc[2], (256,), 0, NUM_CLASS, dtype=jnp.int32)
    domain_c = jax.random.randint(kc[3], (256,), 0, DATASET_NUM, dtype=jnp.int32)

    out5 = prompt_learner_forward(params, label_c)
    jax.block_until_ready(out5)
    assert jnp.allclose(out5, prompt_learner_ref(params, label_c), atol=1e-6), \
        "no-domain large-batch mismatch"

    out6 = prompt_learner_forward(params, label_c, domain_c)
    jax.block_until_ready(out6)
    assert jnp.allclose(out6, prompt_learner_ref(params, label_c, domain_c),
                        atol=1e-6), "domain large-batch mismatch"

    print("KERNEL_OK")
</pallas_src>

<mosaic_0001>
module attributes {stable_mosaic.version = 11 : i64} {
  func.func @_gather_prompts_kernel(%arg0: i32, %arg1: memref<2xi32, #tpu.memory_space<smem>>, %arg2: memref<6x16x128xf32, #tpu.memory_space<vmem>>, %arg3: memref<2x16x128xf32, #tpu.memory_space<vmem>>) attributes {dimension_semantics = [#tpu.dimension_semantics<parallel>], iteration_bounds = array<i64: 1>, scalar_prefetch = 1 : i64, scratch_operands = 0 : i64, tpu.core_type = #tpu.core_type<tc>, window_params = [{pipeline_mode = #tpu.pipeline_mode<synchronous>, transform_indices = @transform_0, window_bounds = array<i64: 6, 16, 128>}, {transform_indices = @transform_1, window_bounds = array<i64: 2, 16, 128>}]} {
    %c2_i32 = arith.constant 2 : i32
    %0 = arith.muli %arg0, %c2_i32 : i32
    %c0_i32 = arith.constant 0 : i32
    %1 = arith.addi %0, %c0_i32 : i32
    %2 = arith.index_cast %1 : i32 to index
    %3 = memref.load %arg1[%2] : memref<2xi32, #tpu.memory_space<smem>>
    %4 = arith.index_cast %3 : i32 to index
    %c0 = arith.constant 0 : index
    %c0_0 = arith.constant 0 : index
    %5 = vector.load %arg2[%4, %c0, %c0_0] : memref<6x16x128xf32, #tpu.memory_space<vmem>>, vector<1x16x128xf32>
    %6 = vector.shape_cast %5 : vector<1x16x128xf32> to vector<16x128xf32>
    %c0_1 = arith.constant 0 : index
    %c0_2 = arith.constant 0 : index
    %c0_3 = arith.constant 0 : index
    %7 = vector.load %arg3[%c0_1, %c0_2, %c0_3] : memref<2x16x128xf32, #tpu.memory_space<vmem>>, vector<1x16x128xf32>
    %8 = vector.shape_cast %7 : vector<1x16x128xf32> to vector<16x128xf32>
    %9 = vector.shape_cast %6 : vector<16x128xf32> to vector<1x16x128xf32>
    tpu.vector_store %arg3[%c0_1, %c0_2, %c0_3], %9 {strides = array<i32>} : memref<2x16x128xf32, #tpu.memory_space<vmem>>, vector<1x16x128xf32>,
    %c1_i32 = arith.constant 1 : i32
    %10 = arith.addi %0, %c1_i32 : i32
    %11 = arith.index_cast %10 : i32 to index
    %12 = memref.load %arg1[%11] : memref<2xi32, #tpu.memory_space<smem>>
    %13 = arith.index_cast %12 : i32 to index
    %c0_4 = arith.constant 0 : index
    %c0_5 = arith.constant 0 : index
    %14 = vector.load %arg2[%13, %c0_4, %c0_5] : memref<6x16x128xf32, #tpu.memory_space<vmem>>, vector<1x16x128xf32>
    %15 = vector.shape_cast %14 : vector<1x16x128xf32> to vector<16x128xf32>
    %c1 = arith.constant 1 : index
    %c0_6 = arith.constant 0 : index
    %c0_7 = arith.constant 0 : index
    %16 = vector.load %arg3[%c1, %c0_6, %c0_7] : memref<2x16x128xf32, #tpu.memory_space<vmem>>, vector<1x16x128xf32>
    %17 = vector.shape_cast %16 : vector<1x16x128xf32> to vector<16x128xf32>
    %18 = vector.shape_cast %15 : vector<16x128xf32> to vector<1x16x128xf32>
    tpu.vector_store %arg3[%c1, %c0_6, %c0_7], %18 {strides = array<i32>} : memref<2x16x128xf32, #tpu.memory_space<vmem>>, vector<1x16x128xf32>,
    return
  }
  func.func @transform_0(%arg0: i32, %arg1: memref<2xi32, #tpu.memory_space<smem>>) -> (i32, i32, i32) {
    %c0_i32 = arith.constant 0 : i32
    %c0_i32_0 = arith.constant 0 : i32
    %c0_i32_1 = arith.constant 0 : i32
    %c0_i32_2 = arith.constant 0 : i32
    return %c0_i32, %c0_i32_0, %c0_i32_1 : i32, i32, i32
  }
  func.func @transform_1(%arg0: i32, %arg1: memref<2xi32, #tpu.memory_space<smem>>) -> (i32, i32, i32) {
    %c0_i32 = arith.constant 0 : i32
    %c0_i32_0 = arith.constant 0 : i32
    %c0_i32_1 = arith.constant 0 : i32
    return %arg0, %c0_i32, %c0_i32_0 : i32, i32, i32
  }
}

</mosaic_0001>

<llo_original>
// kernel: tpu_custom_call.1
$region0: #{tpu_custom_call.1}
  #allocation0 [shape = 'u32[]', space=smem, size = 0x4, offset = 0x4, fixed_abs, tag = 'smem constant byte address 0x4 - core index']
  #allocation1 [shape = 'u32[144,128]{1,0:T(1,128)}', space=vmem, size = 0x12000, scoped, tag = 'internal scratch']
  #allocation2 [shape = 's32[1]{0}', space=sflag, size = 0x4, scoped, tag = 'scoped memory for tpu_custom_call.1']
  #allocation3 [shape = 'u8[512]{0}', space=smem, size = 0x200, scoped, tag = 'prefetched SMEM operand 0']
  %s0 = inlined_call_operand.hbm [shape: s32[2], index: 0, kind: input, shape index: {}]
  %s1 = inlined_call_operand.hbm [shape: f32[6,16,128], index: 1, kind: input, shape index: {}]
  %s2 = inlined_call_operand.hbm [shape: f32[2,16,128], index: 2, kind: output, shape index: {}]
  %s3 = sld [smem:[#allocation0]]
  $region18: #{tpu_custom_call.1} parent=0
    _
  %s5 = ssub.s32 1, %s3
  %s6 = scalar_select 0, %s5, %s3
  %8 = dma.hbm_to_smem %s0, 16, [#allocation3], [#allocation2]
  %9 = dma.done [#allocation2], 16
  %10 = sfence
  $region1: #{tpu_custom_call.1} parent=0
    #allocation4 [shape = 'u8[49152]{0}', space=vmem, size = 0xc000, scoped, tag = 'input window, operand 1, single buffered']
    #allocation5 [shape = 's32[1]{0}', space=sflag, size = 0x4, scoped, tag = 'scoped memory for tpu_custom_call.1']
    #allocation6 [shape = 's32[1]{0}', space=sflag, size = 0x4, scoped, tag = 'scoped memory for tpu_custom_call.1']
    #allocation7 [shape = 'u8[16384]{0}', space=vmem, size = 0x4000, scoped, tag = 'output window, operand 0, single buffered']
    %11 = vsyncpa [#allocation5], 0
    %12 = vsyncpa [#allocation6], 0
    // Predicated region
    $region2: #{tpu_custom_call.1} parent=1 // pred_check
      _
    $region3: #{tpu_custom_call.1} parent=1 // pred_check_branch
      %14 = sbr.rel (0) target = $region5
    $region4: #{tpu_custom_call.1} parent=1 // pred_region
      %s16 = ssub.s32 1536, 1536
      %17 = vsyncadd [#allocation5], %s16
      %s18 = sshll.u32 [#allocation4], 4
      %s19 = int_to_ptr.vmem [resolvable:$true] %s18
      %24 = dma.hbm_to_vmem [thread:$0]  %s1, 1536, %s19, [#allocation5], 128, 128, 8
    $region5: #{tpu_custom_call.1} parent=1 // pred_fallthru
      _
    // Predicated region
    $region6: #{tpu_custom_call.1} parent=1 // pred_check
      _
    $region7: #{tpu_custom_call.1} parent=1 // pred_check_branch
      %26 = sbr.rel (0) target = $region9
    $region8: #{tpu_custom_call.1} parent=1 // pred_region
      %27 = dma.done [#allocation5], 1536
    $region9: #{tpu_custom_call.1} parent=1 // pred_fallthru
      _
    %s28 = smul.u32 0, 2
    %s29 = sld [smem:[#allocation3 + %s28]]
    %s30 = smul.u32 %s29, 16
    %s31 = scalar_lea.vmem [#allocation4], %s30
    %v32 = vld [vmem:[%s31] sm:$0xff]
    %v33 = vld [vmem:[%s31 + $0x8] sm:$0xff]
    %34 = vst [vmem:[#allocation7] sm:$0xff] %v32
    %35 = vst [vmem:[#allocation7 + $0x8] sm:$0xff] %v33
    %s36 = sadd.s32 %s28, 1
    %s37 = sld [smem:[#allocation3 + %s36]]
    %s38 = smul.u32 %s37, 16
    %s39 = scalar_lea.vmem [#allocation4], %s38
    %v40 = vld [vmem:[%s39] sm:$0xff]
    %v41 = vld [vmem:[%s39 + $0x8] sm:$0xff]
    %s42 = scalar_lea.vmem [#allocation7], 16
    %43 = vst [vmem:[%s42] sm:$0xff] %v40
    %44 = vst [vmem:[%s42 + $0x8] sm:$0xff] %v41
    // Predicated region
    $region10: #{tpu_custom_call.1} parent=1 // pred_check
      _
    $region11: #{tpu_custom_call.1} parent=1 // pred_check_branch
      %46 = sbr.rel (0) target = $region13
    $region12: #{tpu_custom_call.1} parent=1 // pred_region
      %s48 = ssub.s32 512, 512
      %49 = vsyncadd [#allocation6], %s48
      %s50 = sshll.u32 [#allocation7], 4
      %s51 = int_to_ptr.vmem [resolvable:$true] %s50
      %56 = dma.vmem_to_hbm [thread:$0]  %s51, 512, %s2, [#allocation6], 128, 128, 8
    $region13: #{tpu_custom_call.1} parent=1 // pred_fallthru
      _
    // Predicated region
    $region14: #{tpu_custom_call.1} parent=1 // pred_check
      _
    $region15: #{tpu_custom_call.1} parent=1 // pred_check_branch
      %58 = sbr.rel (0) target = $region17
    $region16: #{tpu_custom_call.1} parent=1 // pred_region
      %59 = dma.done [#allocation6], 512
    $region17: #{tpu_custom_call.1} parent=1 // pred_fallthru
      _
    %60 = vsyncpa [#allocation5], 1
    %61 = vsyncpa [#allocation6], 1

</llo_original>
